<compile_context>
chip_gen: v7x
topology: tpu7x:2x2x1
jax: 0.10.0
libtpu: 0.0.40
codegen_flags: <defaults>
</compile_context>

<pallas_src>
import functools

import jax
import jax.numpy as jnp
from jax.experimental import pallas as pl
from jax.experimental.pallas import tpu as pltpu


_LANES = 128                      # TPU vreg lane width
_MIN_BB = 16                      # bf16 sublane tile height (2 rows / sublane)
_MAX_BB = 512
_VMEM_BLOCK_BUDGET = 24 << 20     # per-block budget; headroom under v7x's 32 MiB scoped default
_VMEM_LIMIT = 48 << 20            # explicit scoped-VMEM limit (< 64 MiB v7x physical)


def _cdiv(a, b):
    return -(-a // b)


def _round_up(a, b):
    return _cdiv(a, b) * b


def _choose_batch_block(B, S, D, hyper, hidden, rep_w, multihead):
    """Largest batch block under the per-block VMEM budget; >=2 blocks when B allows
    so both v7x TensorCores get work via the 'parallel' grid axis."""
    ncat = (rep_w if multihead else 0) + hyper
    bytes_per_row = (
        2 * (2 * S * D)                          # double-buffered bf16 x block
        + 2 * (4 * S * hidden)                   # double-buffered f32 out block
        + 4 * S * (ncat + hyper + 2 * rep_w)     # f32 intermediates (cat, h, gate, b)
        + 2 * 4 * rep_w)                         # double-buffered h0 block
    cap = max(_MIN_BB, min(_MAX_BB,
                           (_VMEM_BLOCK_BUDGET // max(bytes_per_row, 1))
                           // _MIN_BB * _MIN_BB))
    if B <= cap:
        bb = _round_up(B, _MIN_BB)
        if B >= 2 * _MIN_BB:                     # keep >=2 grid blocks
            bb = min(bb, _round_up(_cdiv(B, 2), _MIN_BB))
        return bb
    return cap


def _srnn_kernel(x_ref, wcat_ref, bcat_ref, *rest,
                 num_extra, seq_len, hyper, hidden, gate_width,
                 multihead, lane_aligned):
    """SRNNCell forward for one batch block, fully VMEM resident.

    x_ref    : (S*BB, D) bf16, time-major within the block
    wcat_ref : (D, gate_width + hyper) bf16  -- [fc2 gate (x rep) | fc[0]] fused
    bcat_ref : (1,  gate_width + hyper) f32
    rest     : (w_i bf16, b_i f32) for fc linears 1..L-1 (last lane-replicated to
               rep*hidden cols), then h0 (BB, rep*hidden) f32 (lane-replicated),
               then out (BB, S*hidden) f32.
    """
    extra = [(rest[2 * i], rest[2 * i + 1]) for i in range(num_extra)]
    h0_ref = rest[2 * num_extra]
    out_ref = rest[2 * num_extra + 1]
    bb = h0_ref.shape[0]

    x = x_ref[...]                                              # bf16 (S*BB, D)

    # --- fused first linear (+ replicated fc2 gate logits): ONE bf16 MXU pass ---
    cat = jnp.dot(x, wcat_ref[...],
                  preferred_element_type=jnp.float32) + bcat_ref[...]
    if multihead:
        gate = jax.nn.sigmoid(cat[:, :gate_width])              # f32 EUP, lane-aligned slice
        h = jnp.maximum(cat[:, gate_width:gate_width + hyper], 0.0)
    else:
        h = jnp.maximum(cat[:, :hyper], 0.0)

    # --- remaining fc linears (last has no ReLU, weights lane-replicated) -------
    for li, (w_ref, b_ref) in enumerate(extra):
        h = jnp.dot(h.astype(jnp.bfloat16), w_ref[...],
                    preferred_element_type=jnp.float32) + b_ref[...]
        if li < num_extra - 1:
            h = jnp.maximum(h, 0.0)
    b = h                                   # (S*BB, rep*hidden) f32, lane-replicated

    if multihead:
        b = b * gate                        # gate is replicated the same way

    # --- serial recurrence: prev = relu(b_t + roll(prev, 1, -1)) ----------------
    # prev is carried lane-replicated with period `hidden` across a 128-aligned
    # width, so a single cyclic lane rotate (XLU) by 1 is exactly the width-
    # `hidden` roll: one op on the serial critical path instead of jnp.roll's two
    # slices + concat.  Falls back to jnp.roll when `hidden` does not tile 128.
    if lane_aligned:
        roll1 = lambda v: pltpu.roll(v, 1, 1)
    else:
        roll1 = lambda v: jnp.roll(v, 1, axis=1)

    # Per-step stores go straight into the lane-dense (BB, S*H) output; they are
    # masked (H < 128) but hide under the serial dependency chain (store packing
    # intentionally left alone per review).  S is small; Python unroll keeps the
    # offsets static.
    # TODO(synk): switch to lax.fori_loop + pl.multiple_of'd pl.ds starts if S
    # grows beyond ~32.
    prev = jnp.maximum(b[0:bb, :] + roll1(h0_ref[...]), 0.0)
    out_ref[:, pl.ds(0, hidden)] = prev[:, :hidden]
    for t in range(1, seq_len):
        prev = jnp.maximum(b[t * bb:(t + 1) * bb, :] + roll1(prev), 0.0)
        out_ref[:, pl.ds(t * hidden, hidden)] = prev[:, :hidden]


def init_params(key, input_size, hidden_size, num_layers=1, hyper_size=64):
    """Deterministic nn.Linear-style init; weights stored (in, out)."""
    dims = [(input_size, hyper_size)]
    for _ in range(1, num_layers):
        dims.append((hyper_size, hyper_size))
    dims.append((hyper_size, hidden_size))

    fc_w, fc_b = [], []
    for fan_in, fan_out in dims:
        key, kw, kb = jax.random.split(key, 3)
        bound = 1.0 / float(fan_in) ** 0.5
        fc_w.append(jax.random.uniform(kw, (fan_in, fan_out), jnp.float32, -bound, bound))
        fc_b.append(jax.random.uniform(kb, (1, fan_out), jnp.float32, -bound, bound))

    key, kw, kb = jax.random.split(key, 3)
    bound = 1.0 / float(input_size) ** 0.5
    fc2_w = jax.random.uniform(kw, (input_size, hidden_size), jnp.float32, -bound, bound)
    fc2_b = jax.random.uniform(kb, (1, hidden_size), jnp.float32, -bound, bound)
    return {"fc_w": fc_w, "fc_b": fc_b, "fc2_w": fc2_w, "fc2_b": fc2_b}


def _srnn_cell_forward(x, params, hidden=None, multihead=True):
    """Pallas-backed SRNNCell.forward. x: (B, S, D) float32. Returns (out, hid)."""
    # TODO(synk): the 2-D x path of the PyTorch forward (Linear over the seq axis)
    # is not implemented; kernel assumes 3-D (batch, seq, input_size).
    B, S, D = x.shape
    H = params["fc_w"][-1].shape[1]
    HYPER = params["fc_w"][0].shape[1]
    assert len(params["fc_w"]) >= 2, "fc must contain >=2 linears (as in the nn.Module)"

    # Lane replication for the recurrence state (128-lane-aligned roll).
    if H % _LANES == 0:
        rep, lane_aligned = 1, True
    elif _LANES % H == 0:
        rep, lane_aligned = _LANES // H, True
    else:
        rep, lane_aligned = 1, False
    W = rep * H

    BB = _choose_batch_block(B, S, D, HYPER, H, W, multihead)
    nblk = _cdiv(B, BB)
    B_pad = nblk * BB

    # ---- parameter prep (tiny, fused/const-folded under jit) --------------------
    # fc2 (gate) and the last fc layer are tiled x`rep` along the output dim so the
    # MXU emits lane-replicated values directly (replication is free).
    if multihead:
        wcat = jnp.concatenate([jnp.tile(params["fc2_w"], (1, rep)),
                                params["fc_w"][0]], axis=1)
        bcat = jnp.concatenate([jnp.tile(params["fc2_b"], (1, rep)),
                                params["fc_b"][0]], axis=1)
        gate_width = W
    else:
        wcat, bcat = params["fc_w"][0], params["fc_b"][0]
        gate_width = 0
    wcat = wcat.astype(jnp.bfloat16)
    bcat = bcat.astype(jnp.float32)

    extra_w = [w.astype(jnp.bfloat16) for w in params["fc_w"][1:-1]]
    extra_b = [b.astype(jnp.float32) for b in params["fc_b"][1:-1]]
    extra_w.append(jnp.tile(params["fc_w"][-1], (1, rep)).astype(jnp.bfloat16))
    extra_b.append(jnp.tile(params["fc_b"][-1], (1, rep)).astype(jnp.float32))

    # ---- input prep: pad batch, bf16 cast, per-block time-major permute ---------
    # Under jit this pad + convert + transpose fuses into a single HBM pass over x.
    # TODO(synk): could move fully in-kernel (per-step strided loads of b) to drop
    # the remaining wrapper-side pass over x.
    x_p = jnp.pad(x.astype(jnp.bfloat16), ((0, B_pad - B), (0, 0), (0, 0)))
    x_tm = (x_p.reshape(nblk, BB, S, D)
                .transpose(0, 2, 1, 3)
                .reshape(nblk, S * BB, D))

    h0 = jnp.zeros((B, H), jnp.float32) if hidden is None else hidden.astype(jnp.float32)
    h0_rep = jnp.tile(h0, (1, rep))                       # lane-replicated state
    h0_p = jnp.pad(h0_rep, ((0, B_pad - B), (0, 0))).reshape(nblk, BB, W)

    inputs = [x_tm, wcat, bcat]
    for w, b in zip(extra_w, extra_b):
        inputs += [w, b]
    inputs += [h0_p]

    def _w_spec(a):  # whole-array param block, resident across the batch grid
        return pl.BlockSpec(a.shape, lambda i: (0, 0))

    in_specs = [pl.BlockSpec((None, S * BB, D), lambda i: (i, 0, 0)),
                _w_spec(wcat), _w_spec(bcat)]
    for w, b in zip(extra_w, extra_b):
        in_specs += [_w_spec(w), _w_spec(b)]
    in_specs += [pl.BlockSpec((None, BB, W), lambda i: (i, 0, 0))]

    kernel = functools.partial(
        _srnn_kernel,
        num_extra=len(extra_w), seq_len=S, hyper=HYPER, hidden=H,
        gate_width=gate_width, multihead=multihead, lane_aligned=lane_aligned)

    out2 = pl.pallas_call(
        kernel,
        grid=(nblk,),
        in_specs=in_specs,
        out_specs=pl.BlockSpec((None, BB, S * H), lambda i: (i, 0, 0)),
        out_shape=jax.ShapeDtypeStruct((nblk, BB, S * H), jnp.float32),
        compiler_params=pltpu.CompilerParams(
            dimension_semantics=("parallel",),     # batch blocks shard across cores
            vmem_limit_bytes=_VMEM_LIMIT),
    )(*inputs)

    # Free reshapes only (no transpose): (nblk, BB, S*H) -> (B_pad, S, H) -> slice.
    out3 = out2.reshape(B_pad, S, H)[:B]
    hid = out3[:, -1, :]                      # last step == final hidden state
    out = out3[:, :, 0] if H == 1 else out3   # torch .squeeze(2)
    return out, hid


srnn_cell_forward = jax.jit(_srnn_cell_forward, static_argnames=("multihead",))


def srnn_cell_reference(x, params, hidden=None, multihead=True):
    """Pure-JAX reference mirroring the PyTorch forward (f32, highest precision)."""
    B, S, D = x.shape
    hp = jax.lax.Precision.HIGHEST
    n = len(params["fc_w"])
    h = x
    for li, (w, b) in enumerate(zip(params["fc_w"], params["fc_b"])):
        h = jnp.dot(h, w, precision=hp) + b
        if li < n - 1:
            h = jnp.maximum(h, 0.0)
    bval = h
    if multihead:
        bval = bval * jax.nn.sigmoid(
            jnp.dot(x, params["fc2_w"], precision=hp) + params["fc2_b"])
    if hidden is None:
        prev = jnp.maximum(bval[:, 0], 0.0)
    else:
        prev = jnp.maximum(bval[:, 0] + jnp.roll(hidden, 1, axis=-1), 0.0)
    outs = [prev]
    for t in range(1, S):
        prev = jnp.maximum(bval[:, t] + jnp.roll(prev, 1, axis=-1), 0.0)
        outs.append(prev)
    out = jnp.stack(outs, axis=1)
    hid = out[:, -1, :]
    if out.shape[2] == 1:
        out = out[:, :, 0]
    return out, hid


if __name__ == "__main__":
    B, S, D, H, HYPER = 4, 8, 16, 32, 64

    key = jax.random.PRNGKey(0)
    kp, kx, kh, kx2, kh2 = jax.random.split(key, 5)
    params = init_params(kp, input_size=D, hidden_size=H, num_layers=1, hyper_size=HYPER)
    x = jax.random.normal(kx, (B, S, D), jnp.float32)
    h0 = jax.random.normal(kh, (B, H), jnp.float32)

    # with an initial hidden state
    out, hid = srnn_cell_forward(x, params, hidden=h0)
    out = jax.block_until_ready(out)
    hid = jax.block_until_ready(hid)
    ref_out, ref_hid = srnn_cell_reference(x, params, hidden=h0)
    assert out.shape == (B, S, H) and hid.shape == (B, H)
    assert jnp.allclose(out, ref_out, atol=2e-2, rtol=2e-2)
    assert jnp.allclose(hid, ref_hid, atol=2e-2, rtol=2e-2)

    # hidden=None path
    out2, hid2 = srnn_cell_forward(x, params, hidden=None)
    out2 = jax.block_until_ready(out2)
    ref_out2, ref_hid2 = srnn_cell_reference(x, params, hidden=None)
    assert jnp.allclose(out2, ref_out2, atol=2e-2, rtol=2e-2)
    assert jnp.allclose(hid2, ref_hid2, atol=2e-2, rtol=2e-2)

    # larger batch: exercises adaptive batch block, batch padding and nblk >= 2
    B2 = 40
    x2 = jax.random.normal(kx2, (B2, S, D), jnp.float32)
    h02 = jax.random.normal(kh2, (B2, H), jnp.float32)
    out3, hid3 = srnn_cell_forward(x2, params, hidden=h02)
    out3 = jax.block_until_ready(out3)
    hid3 = jax.block_until_ready(hid3)
    ref_out3, ref_hid3 = srnn_cell_reference(x2, params, hidden=h02)
    assert out3.shape == (B2, S, H) and hid3.shape == (B2, H)
    assert jnp.allclose(out3, ref_out3, atol=3e-2, rtol=3e-2)
    assert jnp.allclose(hid3, ref_hid3, atol=3e-2, rtol=3e-2)

    print("KERNEL_OK")
</pallas_src>

<mosaic_0001>
module attributes {stable_mosaic.version = 11 : i64} {
  func.func @_srnn_kernel(%arg0: i32, %arg1: memref<1x128x16xbf16, #tpu.memory_space<vmem>>, %arg2: memref<16x192xbf16, #tpu.memory_space<vmem>>, %arg3: memref<1x192xf32, #tpu.memory_space<vmem>>, %arg4: memref<64x128xbf16, #tpu.memory_space<vmem>>, %arg5: memref<1x128xf32, #tpu.memory_space<vmem>>, %arg6: memref<1x16x128xf32, #tpu.memory_space<vmem>>, %arg7: memref<1x16x256xf32, #tpu.memory_space<vmem>>) attributes {dimension_semantics = [#tpu.dimension_semantics<parallel>], iteration_bounds = array<i64: 1>, scalar_prefetch = 0 : i64, scratch_operands = 0 : i64, tpu.core_type = #tpu.core_type<tc>, window_params = [{transform_indices = @transform_0, window_bounds = array<i64: 1, 128, 16>}, {pipeline_mode = #tpu.pipeline_mode<synchronous>, transform_indices = @transform_1, window_bounds = array<i64: 16, 192>}, {pipeline_mode = #tpu.pipeline_mode<synchronous>, transform_indices = @transform_2, window_bounds = array<i64: 1, 192>}, {pipeline_mode = #tpu.pipeline_mode<synchronous>, transform_indices = @transform_3, window_bounds = array<i64: 64, 128>}, {pipeline_mode = #tpu.pipeline_mode<synchronous>, transform_indices = @transform_4, window_bounds = array<i64: 1, 128>}, {transform_indices = @transform_5, window_bounds = array<i64: 1, 16, 128>}, {transform_indices = @transform_6, window_bounds = array<i64: 1, 16, 256>}]} {
    %c0 = arith.constant 0 : index
    %c0_0 = arith.constant 0 : index
    %c0_1 = arith.constant 0 : index
    %0 = vector.load %arg1[%c0, %c0_0, %c0_1] : memref<1x128x16xbf16, #tpu.memory_space<vmem>>, vector<1x128x16xbf16>
    %1 = vector.shape_cast %0 : vector<1x128x16xbf16> to vector<128x16xbf16>
    %c0_2 = arith.constant 0 : index
    %c0_3 = arith.constant 0 : index
    %2 = vector.load %arg2[%c0_2, %c0_3] : memref<16x192xbf16, #tpu.memory_space<vmem>>, vector<16x192xbf16>
    %cst = arith.constant dense<0.000000e+00> : vector<128x192xf32>
    %3 = tpu.matmul %1, %2, %cst {dimension_numbers = #tpu.dot_dimension_numbers<[1], [0], [0], [1], [0, 0, 1, 1], [], []>} : vector<128x16xbf16>, vector<16x192xbf16>, vector<128x192xf32> -> vector<128x192xf32>
    %c0_4 = arith.constant 0 : index
    %c0_5 = arith.constant 0 : index
    %4 = vector.load %arg3[%c0_4, %c0_5] : memref<1x192xf32, #tpu.memory_space<vmem>>, vector<1x192xf32>
    %5 = vector.broadcast %4 : vector<1x192xf32> to vector<128x192xf32>
    %6 = arith.addf %3, %5 : vector<128x192xf32>
    %7 = vector.extract_strided_slice %6 {offsets = [0, 0], sizes = [128, 128], strides = [1, 1]} : vector<128x192xf32> to vector<128x128xf32>
    %8 = arith.negf %7 : vector<128x128xf32>
    %9 = math.exp %8 : vector<128x128xf32>
    %cst_6 = arith.constant 1.000000e+00 : f32
    %10 = vector.broadcast %cst_6 : f32 to vector<128x128xf32>
    %11 = arith.addf %10, %9 : vector<128x128xf32>
    %12 = arith.divf %10, %11 : vector<128x128xf32>
    %13 = vector.extract_strided_slice %6 {offsets = [0, 128], sizes = [128, 64], strides = [1, 1]} : vector<128x192xf32> to vector<128x64xf32>
    %cst_7 = arith.constant 0.000000e+00 : f32
    %14 = vector.broadcast %cst_7 : f32 to vector<128x64xf32>
    %15 = arith.maximumf %13, %14 : vector<128x64xf32>
    %16 = arith.truncf %15 : vector<128x64xf32> to vector<128x64xbf16>
    %c0_8 = arith.constant 0 : index
    %c0_9 = arith.constant 0 : index
    %17 = vector.load %arg4[%c0_8, %c0_9] : memref<64x128xbf16, #tpu.memory_space<vmem>>, vector<64x128xbf16>
    %cst_10 = arith.constant dense<0.000000e+00> : vector<128x128xf32>
    %18 = tpu.matmul %16, %17, %cst_10 {dimension_numbers = #tpu.dot_dimension_numbers<[1], [0], [0], [1], [0, 0, 1, 1], [], []>} : vector<128x64xbf16>, vector<64x128xbf16>, vector<128x128xf32> -> vector<128x128xf32>
    %c0_11 = arith.constant 0 : index
    %c0_12 = arith.constant 0 : index
    %19 = vector.load %arg5[%c0_11, %c0_12] : memref<1x128xf32, #tpu.memory_space<vmem>>, vector<1x128xf32>
    %20 = vector.broadcast %19 : vector<1x128xf32> to vector<128x128xf32>
    %21 = arith.addf %18, %20 : vector<128x128xf32>
    %22 = arith.mulf %21, %12 : vector<128x128xf32>
    %23 = vector.extract_strided_slice %22 {offsets = [0, 0], sizes = [16, 128], strides = [1, 1]} : vector<128x128xf32> to vector<16x128xf32>
    %c0_13 = arith.constant 0 : index
    %c0_14 = arith.constant 0 : index
    %c0_15 = arith.constant 0 : index
    %24 = vector.load %arg6[%c0_13, %c0_14, %c0_15] : memref<1x16x128xf32, #tpu.memory_space<vmem>>, vector<1x16x128xf32>
    %25 = vector.shape_cast %24 : vector<1x16x128xf32> to vector<16x128xf32>
    %c1_i32 = arith.constant 1 : i32
    %26 = tpu.dynamic_rotate %25 by %c1_i32 dim 1 : vector<16x128xf32>, i32 -> vector<16x128xf32>
    %27 = arith.addf %23, %26 : vector<16x128xf32>
    %cst_16 = arith.constant 0.000000e+00 : f32
    %28 = vector.broadcast %cst_16 : f32 to vector<16x128xf32>
    %29 = arith.maximumf %27, %28 : vector<16x128xf32>
    %30 = vector.extract_strided_slice %29 {offsets = [0, 0], sizes = [16, 32], strides = [1, 1]} : vector<16x128xf32> to vector<16x32xf32>
    %c0_17 = arith.constant 0 : index
    %c0_18 = arith.constant 0 : index
    %c0_19 = arith.constant 0 : index
    %31 = vector.load %arg7[%c0_17, %c0_18, %c0_19] : memref<1x16x256xf32, #tpu.memory_space<vmem>>, vector<1x16x32xf32>
    %32 = vector.shape_cast %31 : vector<1x16x32xf32> to vector<16x32xf32>
    %33 = vector.shape_cast %30 : vector<16x32xf32> to vector<1x16x32xf32>
    tpu.vector_store %arg7[%c0_17, %c0_18, %c0_19], %33 {strides = array<i32>} : memref<1x16x256xf32, #tpu.memory_space<vmem>>, vector<1x16x32xf32>,
    %34 = vector.extract_strided_slice %22 {offsets = [16, 0], sizes = [16, 128], strides = [1, 1]} : vector<128x128xf32> to vector<16x128xf32>
    %c1_i32_20 = arith.constant 1 : i32
    %35 = tpu.dynamic_rotate %29 by %c1_i32_20 dim 1 : vector<16x128xf32>, i32 -> vector<16x128xf32>
    %36 = arith.addf %34, %35 : vector<16x128xf32>
    %cst_21 = arith.constant 0.000000e+00 : f32
    %37 = vector.broadcast %cst_21 : f32 to vector<16x128xf32>
    %38 = arith.maximumf %36, %37 : vector<16x128xf32>
    %39 = vector.extract_strided_slice %38 {offsets = [0, 0], sizes = [16, 32], strides = [1, 1]} : vector<16x128xf32> to vector<16x32xf32>
    %c0_22 = arith.constant 0 : index
    %c0_23 = arith.constant 0 : index
    %c32 = arith.constant 32 : index
    %40 = vector.load %arg7[%c0_22, %c0_23, %c32] : memref<1x16x256xf32, #tpu.memory_space<vmem>>, vector<1x16x32xf32>
    %41 = vector.shape_cast %40 : vector<1x16x32xf32> to vector<16x32xf32>
    %42 = vector.shape_cast %39 : vector<16x32xf32> to vector<1x16x32xf32>
    tpu.vector_store %arg7[%c0_22, %c0_23, %c32], %42 {strides = array<i32>} : memref<1x16x256xf32, #tpu.memory_space<vmem>>, vector<1x16x32xf32>,
    %43 = vector.extract_strided_slice %22 {offsets = [32, 0], sizes = [16, 128], strides = [1, 1]} : vector<128x128xf32> to vector<16x128xf32>
    %c1_i32_24 = arith.constant 1 : i32
    %44 = tpu.dynamic_rotate %38 by %c1_i32_24 dim 1 : vector<16x128xf32>, i32 -> vector<16x128xf32>
    %45 = arith.addf %43, %44 : vector<16x128xf32>
    %cst_25 = arith.constant 0.000000e+00 : f32
    %46 = vector.broadcast %cst_25 : f32 to vector<16x128xf32>
    %47 = arith.maximumf %45, %46 : vector<16x128xf32>
    %48 = vector.extract_strided_slice %47 {offsets = [0, 0], sizes = [16, 32], strides = [1, 1]} : vector<16x128xf32> to vector<16x32xf32>
    %c0_26 = arith.constant 0 : index
    %c0_27 = arith.constant 0 : index
    %c64 = arith.constant 64 : index
    %49 = vector.load %arg7[%c0_26, %c0_27, %c64] : memref<1x16x256xf32, #tpu.memory_space<vmem>>, vector<1x16x32xf32>
    %50 = vector.shape_cast %49 : vector<1x16x32xf32> to vector<16x32xf32>
    %51 = vector.shape_cast %48 : vector<16x32xf32> to vector<1x16x32xf32>
    tpu.vector_store %arg7[%c0_26, %c0_27, %c64], %51 {strides = array<i32>} : memref<1x16x256xf32, #tpu.memory_space<vmem>>, vector<1x16x32xf32>,
    %52 = vector.extract_strided_slice %22 {offsets = [48, 0], sizes = [16, 128], strides = [1, 1]} : vector<128x128xf32> to vector<16x128xf32>
    %c1_i32_28 = arith.constant 1 : i32
    %53 = tpu.dynamic_rotate %47 by %c1_i32_28 dim 1 : vector<16x128xf32>, i32 -> vector<16x128xf32>
    %54 = arith.addf %52, %53 : vector<16x128xf32>
    %cst_29 = arith.constant 0.000000e+00 : f32
    %55 = vector.broadcast %cst_29 : f32 to vector<16x128xf32>
    %56 = arith.maximumf %54, %55 : vector<16x128xf32>
    %57 = vector.extract_strided_slice %56 {offsets = [0, 0], sizes = [16, 32], strides = [1, 1]} : vector<16x128xf32> to vector<16x32xf32>
    %c0_30 = arith.constant 0 : index
    %c0_31 = arith.constant 0 : index
    %c96 = arith.constant 96 : index
    %58 = vector.load %arg7[%c0_30, %c0_31, %c96] : memref<1x16x256xf32, #tpu.memory_space<vmem>>, vector<1x16x32xf32>
    %59 = vector.shape_cast %58 : vector<1x16x32xf32> to vector<16x32xf32>
    %60 = vector.shape_cast %57 : vector<16x32xf32> to vector<1x16x32xf32>
    tpu.vector_store %arg7[%c0_30, %c0_31, %c96], %60 {strides = array<i32>} : memref<1x16x256xf32, #tpu.memory_space<vmem>>, vector<1x16x32xf32>,
    %61 = vector.extract_strided_slice %22 {offsets = [64, 0], sizes = [16, 128], strides = [1, 1]} : vector<128x128xf32> to vector<16x128xf32>
    %c1_i32_32 = arith.constant 1 : i32
    %62 = tpu.dynamic_rotate %56 by %c1_i32_32 dim 1 : vector<16x128xf32>, i32 -> vector<16x128xf32>
    %63 = arith.addf %61, %62 : vector<16x128xf32>
    %cst_33 = arith.constant 0.000000e+00 : f32
    %64 = vector.broadcast %cst_33 : f32 to vector<16x128xf32>
    %65 = arith.maximumf %63, %64 : vector<16x128xf32>
    %66 = vector.extract_strided_slice %65 {offsets = [0, 0], sizes = [16, 32], strides = [1, 1]} : vector<16x128xf32> to vector<16x32xf32>
    %c0_34 = arith.constant 0 : index
    %c0_35 = arith.constant 0 : index
    %c128 = arith.constant 128 : index
    %67 = vector.load %arg7[%c0_34, %c0_35, %c128] : memref<1x16x256xf32, #tpu.memory_space<vmem>>, vector<1x16x32xf32>
    %68 = vector.shape_cast %67 : vector<1x16x32xf32> to vector<16x32xf32>
    %69 = vector.shape_cast %66 : vector<16x32xf32> to vector<1x16x32xf32>
    tpu.vector_store %arg7[%c0_34, %c0_35, %c128], %69 {strides = array<i32>} : memref<1x16x256xf32, #tpu.memory_space<vmem>>, vector<1x16x32xf32>,
    %70 = vector.extract_strided_slice %22 {offsets = [80, 0], sizes = [16, 128], strides = [1, 1]} : vector<128x128xf32> to vector<16x128xf32>
    %c1_i32_36 = arith.constant 1 : i32
    %71 = tpu.dynamic_rotate %65 by %c1_i32_36 dim 1 : vector<16x128xf32>, i32 -> vector<16x128xf32>
    %72 = arith.addf %70, %71 : vector<16x128xf32>
    %cst_37 = arith.constant 0.000000e+00 : f32
    %73 = vector.broadcast %cst_37 : f32 to vector<16x128xf32>
    %74 = arith.maximumf %72, %73 : vector<16x128xf32>
    %75 = vector.extract_strided_slice %74 {offsets = [0, 0], sizes = [16, 32], strides = [1, 1]} : vector<16x128xf32> to vector<16x32xf32>
    %c0_38 = arith.constant 0 : index
    %c0_39 = arith.constant 0 : index
    %c160 = arith.constant 160 : index
    %76 = vector.load %arg7[%c0_38, %c0_39, %c160] : memref<1x16x256xf32, #tpu.memory_space<vmem>>, vector<1x16x32xf32>
    %77 = vector.shape_cast %76 : vector<1x16x32xf32> to vector<16x32xf32>
    %78 = vector.shape_cast %75 : vector<16x32xf32> to vector<1x16x32xf32>
    tpu.vector_store %arg7[%c0_38, %c0_39, %c160], %78 {strides = array<i32>} : memref<1x16x256xf32, #tpu.memory_space<vmem>>, vector<1x16x32xf32>,
    %79 = vector.extract_strided_slice %22 {offsets = [96, 0], sizes = [16, 128], strides = [1, 1]} : vector<128x128xf32> to vector<16x128xf32>
    %c1_i32_40 = arith.constant 1 : i32
    %80 = tpu.dynamic_rotate %74 by %c1_i32_40 dim 1 : vector<16x128xf32>, i32 -> vector<16x128xf32>
    %81 = arith.addf %79, %80 : vector<16x128xf32>
    %cst_41 = arith.constant 0.000000e+00 : f32
    %82 = vector.broadcast %cst_41 : f32 to vector<16x128xf32>
    %83 = arith.maximumf %81, %82 : vector<16x128xf32>
    %84 = vector.extract_strided_slice %83 {offsets = [0, 0], sizes = [16, 32], strides = [1, 1]} : vector<16x128xf32> to vector<16x32xf32>
    %c0_42 = arith.constant 0 : index
    %c0_43 = arith.constant 0 : index
    %c192 = arith.constant 192 : index
    %85 = vector.load %arg7[%c0_42, %c0_43, %c192] : memref<1x16x256xf32, #tpu.memory_space<vmem>>, vector<1x16x32xf32>
    %86 = vector.shape_cast %85 : vector<1x16x32xf32> to vector<16x32xf32>
    %87 = vector.shape_cast %84 : vector<16x32xf32> to vector<1x16x32xf32>
    tpu.vector_store %arg7[%c0_42, %c0_43, %c192], %87 {strides = array<i32>} : memref<1x16x256xf32, #tpu.memory_space<vmem>>, vector<1x16x32xf32>,
    %88 = vector.extract_strided_slice %22 {offsets = [112, 0], sizes = [16, 128], strides = [1, 1]} : vector<128x128xf32> to vector<16x128xf32>
    %c1_i32_44 = arith.constant 1 : i32
    %89 = tpu.dynamic_rotate %83 by %c1_i32_44 dim 1 : vector<16x128xf32>, i32 -> vector<16x128xf32>
    %90 = arith.addf %88, %89 : vector<16x128xf32>
    %cst_45 = arith.constant 0.000000e+00 : f32
    %91 = vector.broadcast %cst_45 : f32 to vector<16x128xf32>
    %92 = arith.maximumf %90, %91 : vector<16x128xf32>
    %93 = vector.extract_strided_slice %92 {offsets = [0, 0], sizes = [16, 32], strides = [1, 1]} : vector<16x128xf32> to vector<16x32xf32>
    %c0_46 = arith.constant 0 : index
    %c0_47 = arith.constant 0 : index
    %c224 = arith.constant 224 : index
    %94 = vector.load %arg7[%c0_46, %c0_47, %c224] : memref<1x16x256xf32, #tpu.memory_space<vmem>>, vector<1x16x32xf32>
    %95 = vector.shape_cast %94 : vector<1x16x32xf32> to vector<16x32xf32>
    %96 = vector.shape_cast %93 : vector<16x32xf32> to vector<1x16x32xf32>
    tpu.vector_store %arg7[%c0_46, %c0_47, %c224], %96 {strides = array<i32>} : memref<1x16x256xf32, #tpu.memory_space<vmem>>, vector<1x16x32xf32>,
    return
  }
  func.func @transform_0(%arg0: i32) -> (i32, i32, i32) {
    %c0_i32 = arith.constant 0 : i32
    %c0_i32_0 = arith.constant 0 : i32
    %c0_i32_1 = arith.constant 0 : i32
    return %arg0, %c0_i32, %c0_i32_0 : i32, i32, i32
  }
  func.func @transform_1(%arg0: i32) -> (i32, i32) {
    %c0_i32 = arith.constant 0 : i32
    %c0_i32_0 = arith.constant 0 : i32
    %c0_i32_1 = arith.constant 0 : i32
    return %c0_i32, %c0_i32_0 : i32, i32
  }
  func.func @transform_2(%arg0: i32) -> (i32, i32) {
    %c0_i32 = arith.constant 0 : i32
    %c0_i32_0 = arith.constant 0 : i32
    %c0_i32_1 = arith.constant 0 : i32
    return %c0_i32, %c0_i32_0 : i32, i32
  }
  func.func @transform_3(%arg0: i32) -> (i32, i32) {
    %c0_i32 = arith.constant 0 : i32
    %c0_i32_0 = arith.constant 0 : i32
    %c0_i32_1 = arith.constant 0 : i32
    return %c0_i32, %c0_i32_0 : i32, i32
  }
  func.func @transform_4(%arg0: i32) -> (i32, i32) {
    %c0_i32 = arith.constant 0 : i32
    %c0_i32_0 = arith.constant 0 : i32
    %c0_i32_1 = arith.constant 0 : i32
    return %c0_i32, %c0_i32_0 : i32, i32
  }
  func.func @transform_5(%arg0: i32) -> (i32, i32, i32) {
    %c0_i32 = arith.constant 0 : i32
    %c0_i32_0 = arith.constant 0 : i32
    %c0_i32_1 = arith.constant 0 : i32
    return %arg0, %c0_i32, %c0_i32_0 : i32, i32, i32
  }
  func.func @transform_6(%arg0: i32) -> (i32, i32, i32) {
    %c0_i32 = arith.constant 0 : i32
    %c0_i32_0 = arith.constant 0 : i32
    %c0_i32_1 = arith.constant 0 : i32
    return %arg0, %c0_i32, %c0_i32_0 : i32, i32, i32
  }
}

</mosaic_0001>

<llo_original>
// kernel: tile.0
$region0: #{tile.0}
  %s0 = inlined_call_operand.vmem [shape: bf16[16,4,32], index: 0, kind: input, shape index: {}]
  %s1 = inlined_call_operand.vmem [shape: bf16[16,128], index: 1, kind: output, shape index: {}]
  $region1: #{tile.0} parent=0
    #allocation0 [shape = 'u8[8192]{0}', space=vmem, size = 0x2000, scoped, tag = 'scoped mem for output reshape']
    #allocation1 [shape = 'u8[65536]{0}', space=vmem, size = 0x10000, scoped, tag = 'scoped mem for input reshape']
    %s3 = smul.u32 2, 2
    %s4 = sshllo.u32 0, %s3
    %s5 = smul.addr 2, 15
    %s6 = scalar_lea.vmem %s0, %s5
    %s7 = sshrl.u32 %s4, 1
    %s8 = sor.u32 %s4, %s7
    %s9 = sand.u32 %s8, 85
    %s10 = sshrl.u32 %s9, 1
    %s11 = sor.u32 %s9, %s10
    %s12 = sand.u32 51, %s11
    %s13 = sshrl.u32 %s12, 2
    %s14 = sor.u32 %s12, %s13
    %s15 = sand.u32 15, %s14
    %v16 = vld [vmem:[%s6] sm:%s15]
    %v17 = vunpack.c.l.bf16 %v16
    %v18 = vunpack.c.h.bf16 %v16
    %s19 = scalar_lea.vmem [#allocation1], 120
    %20 = vst [vmem:[%s19] sm:%s4] %v17
    %s21 = smul.addr 2, 14
    %s22 = scalar_lea.vmem %s0, %s21
    %s23 = sshrl.u32 %s4, 1
    %s24 = sor.u32 %s4, %s23
    %s25 = sand.u32 %s24, 85
    %s26 = sshrl.u32 %s25, 1
    %s27 = sor.u32 %s25, %s26
    %s28 = sand.u32 51, %s27
    %s29 = sshrl.u32 %s28, 2
    %s30 = sor.u32 %s28, %s29
    %s31 = sand.u32 15, %s30
    %v32 = vld [vmem:[%s22] sm:%s31]
    %v33 = vunpack.c.l.bf16 %v32
    %v34 = vunpack.c.h.bf16 %v32
    %s35 = scalar_lea.vmem [#allocation1], 112
    %36 = vst [vmem:[%s35] sm:%s4] %v33
    %s37 = smul.addr 2, 13
    %s38 = scalar_lea.vmem %s0, %s37
    %s39 = sshrl.u32 %s4, 1
    %s40 = sor.u32 %s4, %s39
    %s41 = sand.u32 %s40, 85
    %s42 = sshrl.u32 %s41, 1
    %s43 = sor.u32 %s41, %s42
    %s44 = sand.u32 51, %s43
    %s45 = sshrl.u32 %s44, 2
    %s46 = sor.u32 %s44, %s45
    %s47 = sand.u32 15, %s46
    %v48 = vld [vmem:[%s38] sm:%s47]
    %v49 = vunpack.c.l.bf16 %v48
    %v50 = vunpack.c.h.bf16 %v48
    %s51 = scalar_lea.vmem [#allocation1], 104
    %52 = vst [vmem:[%s51] sm:%s4] %v49
    %s53 = smul.addr 2, 12
    %s54 = scalar_lea.vmem %s0, %s53
    %s55 = sshrl.u32 %s4, 1
    %s56 = sor.u32 %s4, %s55
    %s57 = sand.u32 %s56, 85
    %s58 = sshrl.u32 %s57, 1
    %s59 = sor.u32 %s57, %s58
    %s60 = sand.u32 51, %s59
    %s61 = sshrl.u32 %s60, 2
    %s62 = sor.u32 %s60, %s61
    %s63 = sand.u32 15, %s62
    %v64 = vld [vmem:[%s54] sm:%s63]
    %v65 = vunpack.c.l.bf16 %v64
    %v66 = vunpack.c.h.bf16 %v64
    %s67 = scalar_lea.vmem [#allocation1], 96
    %68 = vst [vmem:[%s67] sm:%s4] %v65
    %s69 = smul.addr 2, 11
    %s70 = scalar_lea.vmem %s0, %s69
    %s71 = sshrl.u32 %s4, 1
    %s72 = sor.u32 %s4, %s71
    %s73 = sand.u32 %s72, 85
    %s74 = sshrl.u32 %s73, 1
    %s75 = sor.u32 %s73, %s74
    %s76 = sand.u32 51, %s75
    %s77 = sshrl.u32 %s76, 2
    %s78 = sor.u32 %s76, %s77
    %s79 = sand.u32 15, %s78
    %v80 = vld [vmem:[%s70] sm:%s79]
    %v81 = vunpack.c.l.bf16 %v80
    %v82 = vunpack.c.h.bf16 %v80
    %s83 = scalar_lea.vmem [#allocation1], 88
    %84 = vst [vmem:[%s83] sm:%s4] %v81
    %s85 = smul.addr 2, 10
    %s86 = scalar_lea.vmem %s0, %s85
    %s87 = sshrl.u32 %s4, 1
    %s88 = sor.u32 %s4, %s87
    %s89 = sand.u32 %s88, 85
    %s90 = sshrl.u32 %s89, 1
    %s91 = sor.u32 %s89, %s90
    %s92 = sand.u32 51, %s91
    %s93 = sshrl.u32 %s92, 2
    %s94 = sor.u32 %s92, %s93
    %s95 = sand.u32 15, %s94
    %v96 = vld [vmem:[%s86] sm:%s95]
    %v97 = vunpack.c.l.bf16 %v96
    %v98 = vunpack.c.h.bf16 %v96
    %s99 = scalar_lea.vmem [#allocation1], 80
    %100 = vst [vmem:[%s99] sm:%s4] %v97
    %s101 = smul.addr 2, 9
    %s102 = scalar_lea.vmem %s0, %s101
    %s103 = sshrl.u32 %s4, 1
    %s104 = sor.u32 %s4, %s103
    %s105 = sand.u32 %s104, 85
    %s106 = sshrl.u32 %s105, 1
    %s107 = sor.u32 %s105, %s106
    %s108 = sand.u32 51, %s107
    %s109 = sshrl.u32 %s108, 2
    %s110 = sor.u32 %s108, %s109
    %s111 = sand.u32 15, %s110
    %v112 = vld [vmem:[%s102] sm:%s111]
    %v113 = vunpack.c.l.bf16 %v112
    %v114 = vunpack.c.h.bf16 %v112
    %s115 = scalar_lea.vmem [#allocation1], 72
    %116 = vst [vmem:[%s115] sm:%s4] %v113
    %s117 = smul.addr 2, 8
    %s118 = scalar_lea.vmem %s0, %s117
    %s119 = sshrl.u32 %s4, 1
    %s120 = sor.u32 %s4, %s119
    %s121 = sand.u32 %s120, 85
    %s122 = sshrl.u32 %s121, 1
    %s123 = sor.u32 %s121, %s122
    %s124 = sand.u32 51, %s123
    %s125 = sshrl.u32 %s124, 2
    %s126 = sor.u32 %s124, %s125
    %s127 = sand.u32 15, %s126
    %v128 = vld [vmem:[%s118] sm:%s127]
    %v129 = vunpack.c.l.bf16 %v128
    %v130 = vunpack.c.h.bf16 %v128
    %s131 = scalar_lea.vmem [#allocation1], 64
    %132 = vst [vmem:[%s131] sm:%s4] %v129
    %s133 = smul.addr 2, 7
    %s134 = scalar_lea.vmem %s0, %s133
    %s135 = sshrl.u32 %s4, 1
    %s136 = sor.u32 %s4, %s135
    %s137 = sand.u32 %s136, 85
    %s138 = sshrl.u32 %s137, 1
    %s139 = sor.u32 %s137, %s138
    %s140 = sand.u32 51, %s139
    %s141 = sshrl.u32 %s140, 2
    %s142 = sor.u32 %s140, %s141
    %s143 = sand.u32 15, %s142
    %v144 = vld [vmem:[%s134] sm:%s143]
    %v145 = vunpack.c.l.bf16 %v144
    %v146 = vunpack.c.h.bf16 %v144
    %s147 = scalar_lea.vmem [#allocation1], 56
    %148 = vst [vmem:[%s147] sm:%s4] %v145
    %s149 = smul.addr 2, 6
    %s150 = scalar_lea.vmem %s0, %s149
    %s151 = sshrl.u32 %s4, 1
    %s152 = sor.u32 %s4, %s151
    %s153 = sand.u32 %s152, 85
    %s154 = sshrl.u32 %s153, 1
    %s155 = sor.u32 %s153, %s154
    %s156 = sand.u32 51, %s155
    %s157 = sshrl.u32 %s156, 2
    %s158 = sor.u32 %s156, %s157
    %s159 = sand.u32 15, %s158
    %v160 = vld [vmem:[%s150] sm:%s159]
    %v161 = vunpack.c.l.bf16 %v160
    %v162 = vunpack.c.h.bf16 %v160
    %s163 = scalar_lea.vmem [#allocation1], 48
    %164 = vst [vmem:[%s163] sm:%s4] %v161
    %s165 = smul.addr 2, 5
    %s166 = scalar_lea.vmem %s0, %s165
    %s167 = sshrl.u32 %s4, 1
    %s168 = sor.u32 %s4, %s167
    %s169 = sand.u32 %s168, 85
    %s170 = sshrl.u32 %s169, 1
    %s171 = sor.u32 %s169, %s170
    %s172 = sand.u32 51, %s171
    %s173 = sshrl.u32 %s172, 2
    %s174 = sor.u32 %s172, %s173
    %s175 = sand.u32 15, %s174
    %v176 = vld [vmem:[%s166] sm:%s175]
    %v177 = vunpack.c.l.bf16 %v176
    %v178 = vunpack.c.h.bf16 %v176
    %s179 = scalar_lea.vmem [#allocation1], 40
    %180 = vst [vmem:[%s179] sm:%s4] %v177
    %s181 = smul.addr 2, 4
    %s182 = scalar_lea.vmem %s0, %s181
    %s183 = sshrl.u32 %s4, 1
    %s184 = sor.u32 %s4, %s183
    %s185 = sand.u32 %s184, 85
    %s186 = sshrl.u32 %s185, 1
    %s187 = sor.u32 %s185, %s186
    %s188 = sand.u32 51, %s187
    %s189 = sshrl.u32 %s188, 2
    %s190 = sor.u32 %s188, %s189
    %s191 = sand.u32 15, %s190
    %v192 = vld [vmem:[%s182] sm:%s191]
    %v193 = vunpack.c.l.bf16 %v192
    %v194 = vunpack.c.h.bf16 %v192
    %s195 = scalar_lea.vmem [#allocation1], 32
    %196 = vst [vmem:[%s195] sm:%s4] %v193
    %s197 = smul.addr 2, 3
    %s198 = scalar_lea.vmem %s0, %s197
    %s199 = sshrl.u32 %s4, 1
    %s200 = sor.u32 %s4, %s199
    %s201 = sand.u32 %s200, 85
    %s202 = sshrl.u32 %s201, 1
    %s203 = sor.u32 %s201, %s202
    %s204 = sand.u32 51, %s203
    %s205 = sshrl.u32 %s204, 2
    %s206 = sor.u32 %s204, %s205
    %s207 = sand.u32 15, %s206
    %v208 = vld [vmem:[%s198] sm:%s207]
    %v209 = vunpack.c.l.bf16 %v208
    %v210 = vunpack.c.h.bf16 %v208
    %s211 = scalar_lea.vmem [#allocation1], 24
    %212 = vst [vmem:[%s211] sm:%s4] %v209
    %s213 = smul.addr 2, 2
    %s214 = scalar_lea.vmem %s0, %s213
    %s215 = sshrl.u32 %s4, 1
    %s216 = sor.u32 %s4, %s215
    %s217 = sand.u32 %s216, 85
    %s218 = sshrl.u32 %s217, 1
    %s219 = sor.u32 %s217, %s218
    %s220 = sand.u32 51, %s219
    %s221 = sshrl.u32 %s220, 2
    %s222 = sor.u32 %s220, %s221
    %s223 = sand.u32 15, %s222
    %v224 = vld [vmem:[%s214] sm:%s223]
    %v225 = vunpack.c.l.bf16 %v224
    %v226 = vunpack.c.h.bf16 %v224
    %s227 = scalar_lea.vmem [#allocation1], 16
    %228 = vst [vmem:[%s227] sm:%s4] %v225
    %s229 = scalar_lea.vmem %s0, 2
    %s230 = sshrl.u32 %s4, 1
    %s231 = sor.u32 %s4, %s230
    %s232 = sand.u32 %s231, 85
    %s233 = sshrl.u32 %s232, 1
    %s234 = sor.u32 %s232, %s233
    %s235 = sand.u32 51, %s234
    %s236 = sshrl.u32 %s235, 2
    %s237 = sor.u32 %s235, %s236
    %s238 = sand.u32 15, %s237
    %v239 = vld [vmem:[%s229] sm:%s238]
    %v240 = vunpack.c.l.bf16 %v239
    %v241 = vunpack.c.h.bf16 %v239
    %s242 = scalar_lea.vmem [#allocation1], 8
    %243 = vst [vmem:[%s242] sm:%s4] %v240
    %s244 = sshrl.u32 %s4, 1
    %s245 = sor.u32 %s4, %s244
    %s246 = sand.u32 %s245, 85
    %s247 = sshrl.u32 %s246, 1
    %s248 = sor.u32 %s246, %s247
    %s249 = sand.u32 51, %s248
    %s250 = sshrl.u32 %s249, 2
    %s251 = sor.u32 %s249, %s250
    %s252 = sand.u32 15, %s251
    %v253 = vld [vmem:[%s0] sm:%s252]
    %v254 = vunpack.c.l.bf16 %v253
    %v255 = vunpack.c.h.bf16 %v253
    %256 = vst [vmem:[#allocation1] sm:%s4] %v254
    %v257 = vld [vmem:[#allocation1] ss:$8 sm:$0xf]
    %v258 = vld [vmem:[#allocation1] ss:$8 sm:$0xf0]
    %vm259 = vcmask 1047556
    %v260 = vsel %vm259, %v258, %v257
    %vm261 = vcmask 261120
    %262 = vst.msk [vmem:[#allocation0] sm:$0xff] %vm261, %v260
    %s263 = scalar_lea.vmem [#allocation1], 64
    %v264 = vld [vmem:[%s263] ss:$8 sm:$0xf]
    %s265 = scalar_lea.vmem [#allocation1], 64
    %v266 = vld [vmem:[%s265] ss:$8 sm:$0xf0]
    %vm267 = vcmask 1047556
    %v268 = vsel %vm267, %v266, %v264
    %vm269 = vcmask 261120
    %s270 = scalar_lea.vmem [#allocation0], 8
    %271 = vst.msk [vmem:[%s270] sm:$0xff] %vm269, %v268
    %s272 = scalar_lea.vmem [#allocation1], 3
    %v273 = vld [vmem:[%s272] ss:$8 sm:$0xf]
    %s274 = scalar_lea.vmem [#allocation1], 3
    %v275 = vld [vmem:[%s274] ss:$8 sm:$0xf0]
    %vm276 = vcmask 1047556
    %v277 = vsel %vm276, %v275, %v273
    %278 = vrot.lane.b32.xlu0 %v277, 96
    %v279 = vpop.permute.xlu0 %278
    %vm280 = vcmask 1048320
    %281 = vst.msk [vmem:[#allocation0] sm:$0xff] %vm280, %v279
    %s282 = scalar_lea.vmem [#allocation1], 67
    %v283 = vld [vmem:[%s282] ss:$8 sm:$0xf]
    %s284 = scalar_lea.vmem [#allocation1], 67
    %v285 = vld [vmem:[%s284] ss:$8 sm:$0xf0]
    %vm286 = vcmask 1047556
    %v287 = vsel %vm286, %v285, %v283
    %288 = vrot.lane.b32.xlu0 %v287, 96
    %v289 = vpop.permute.xlu0 %288
    %vm290 = vcmask 1048320
    %s291 = scalar_lea.vmem [#allocation0], 8
    %292 = vst.msk [vmem:[%s291] sm:$0xff] %vm290, %v289
    %s293 = scalar_lea.vmem [#allocation1], 2
    %v294 = vld [vmem:[%s293] ss:$8 sm:$0xf]
    %s295 = scalar_lea.vmem [#allocation1], 2
    %v296 = vld [vmem:[%s295] ss:$8 sm:$0xf0]
    %vm297 = vcmask 1047556
    %v298 = vsel %vm297, %v296, %v294
    %299 = vrot.lane.b32.xlu0 %v298, 64
    %v300 = vpop.permute.xlu0 %299
    %vm301 = vcmask 785920
    %302 = vst.msk [vmem:[#allocation0] sm:$0xff] %vm301, %v300
    %s303 = scalar_lea.vmem [#allocation1], 66
    %v304 = vld [vmem:[%s303] ss:$8 sm:$0xf]
    %s305 = scalar_lea.vmem [#allocation1], 66
    %v306 = vld [vmem:[%s305] ss:$8 sm:$0xf0]
    %vm307 = vcmask 1047556
    %v308 = vsel %vm307, %v306, %v304
    %309 = vrot.lane.b32.xlu0 %v308, 64
    %v310 = vpop.permute.xlu0 %309
    %vm311 = vcmask 785920
    %s312 = scalar_lea.vmem [#allocation0], 8
    %313 = vst.msk [vmem:[%s312] sm:$0xff] %vm311, %v310
    %s314 = scalar_lea.vmem [#allocation1], 1
    %v315 = vld [vmem:[%s314] ss:$8 sm:$0xf]
    %s316 = scalar_lea.vmem [#allocation1], 1
    %v317 = vld [vmem:[%s316] ss:$8 sm:$0xf0]
    %vm318 = vcmask 1047556
    %v319 = vsel %vm318, %v317, %v315
    %320 = vrot.lane.b32.xlu0 %v319, 32
    %v321 = vpop.permute.xlu0 %320
    %vm322 = vcmask 523520
    %323 = vst.msk [vmem:[#allocation0] sm:$0xff] %vm322, %v321
    %s324 = scalar_lea.vmem [#allocation1], 65
    %v325 = vld [vmem:[%s324] ss:$8 sm:$0xf]
    %s326 = scalar_lea.vmem [#allocation1], 65
    %v327 = vld [vmem:[%s326] ss:$8 sm:$0xf0]
    %vm328 = vcmask 1047556
    %v329 = vsel %vm328, %v327, %v325
    %330 = vrot.lane.b32.xlu0 %v329, 32
    %v331 = vpop.permute.xlu0 %330
    %vm332 = vcmask 523520
    %s333 = scalar_lea.vmem [#allocation0], 8
    %334 = vst.msk [vmem:[%s333] sm:$0xff] %vm332, %v331
    %s336 = smul.u32 4, 2
    %s337 = sshllo.u32 0, %s336
    %s338 = sshrl.u32 %s336, 1
    %v339 = vld [vmem:[#allocation0] sm:%s337]
    %v340 = vpack.c.bf16 0.0, %v339
    %s341 = sshllo.u32 0, %s338
    %342 = vst [vmem:[%s1] sm:%s341] %v340
    %s343 = scalar_lea.vmem [#allocation0], 8
    %v344 = vld [vmem:[%s343] sm:%s337]
    %v345 = vpack.c.bf16 0.0, %v344
    %s346 = sshllo.u32 0, %s338
    %s347 = scalar_lea.vmem %s1, 4
    %348 = vst [vmem:[%s347] sm:%s346] %v345

// kernel: tile.49
$region0: #{tile.49}
  %s0 = inlined_call_operand.vmem [shape: f32[4,4,32], index: 0, kind: input, shape index: {}]
  %s1 = inlined_call_operand.vmem [shape: f32[4,128], index: 1, kind: output, shape index: {}]
  $region1: #{tile.49} parent=0
    #allocation0 [shape = 'u8[4096]{0}', space=vmem, size = 0x1000, scoped, tag = 'scoped mem for output reshape']
    #allocation1 [shape = 'u8[16384]{0}', space=vmem, size = 0x4000, scoped, tag = 'scoped mem for input reshape']
    %s3 = sshllo.u32 0, 4
    %s4 = smul.addr 4, 3
    %s5 = scalar_lea.vmem %s0, %s4
    %v6 = vld [vmem:[%s5] sm:%s3]
    %s7 = scalar_lea.vmem [#allocation1], 24
    %8 = vst [vmem:[%s7] sm:%s3] %v6
    %s9 = smul.addr 4, 2
    %s10 = scalar_lea.vmem %s0, %s9
    %v11 = vld [vmem:[%s10] sm:%s3]
    %s12 = scalar_lea.vmem [#allocation1], 16
    %13 = vst [vmem:[%s12] sm:%s3] %v11
    %s14 = scalar_lea.vmem %s0, 4
    %v15 = vld [vmem:[%s14] sm:%s3]
    %s16 = scalar_lea.vmem [#allocation1], 8
    %17 = vst [vmem:[%s16] sm:%s3] %v15
    %v18 = vld [vmem:[%s0] sm:%s3]
    %19 = vst [vmem:[#allocation1] sm:%s3] %v18
    %v20 = vld [vmem:[#allocation1] ss:$8 sm:$0xf]
    %vm21 = vcmask 261120
    %22 = vst.msk [vmem:[#allocation0] sm:$0xf] %vm21, %v20
    %s23 = scalar_lea.vmem [#allocation1], 3
    %v24 = vld [vmem:[%s23] ss:$8 sm:$0xf]
    %25 = vrot.lane.b32.xlu0 %v24, 96
    %v26 = vpop.permute.xlu0 %25
    %vm27 = vcmask 1048320
    %28 = vst.msk [vmem:[#allocation0] sm:$0xf] %vm27, %v26
    %s29 = scalar_lea.vmem [#allocation1], 2
    %v30 = vld [vmem:[%s29] ss:$8 sm:$0xf]
    %31 = vrot.lane.b32.xlu0 %v30, 64
    %v32 = vpop.permute.xlu0 %31
    %vm33 = vcmask 785920
    %34 = vst.msk [vmem:[#allocation0] sm:$0xf] %vm33, %v32
    %s35 = scalar_lea.vmem [#allocation1], 1
    %v36 = vld [vmem:[%s35] ss:$8 sm:$0xf]
    %37 = vrot.lane.b32.xlu0 %v36, 32
    %v38 = vpop.permute.xlu0 %37
    %vm39 = vcmask 523520
    %40 = vst.msk [vmem:[#allocation0] sm:$0xf] %vm39, %v38
    %s42 = sshllo.u32 0, 4
    %v44 = vld [vmem:[#allocation0] sm:%s42]
    %s45 = sshllo.u32 0, 4
    %46 = vst [vmem:[%s1] sm:%s45] %v44

// kernel: _srnn_cell_forward.1
$region0: #{_srnn_cell_forward.1}
  #allocation0 [shape = 'u32[]', space=smem, size = 0x4, offset = 0x4, fixed_abs, tag = 'smem constant byte address 0x4 - core index']
  #allocation1 [shape = 'u32[144,128]{1,0:T(1,128)}', space=vmem, size = 0x12000, scoped, tag = 'internal scratch']
  %s0 = inlined_call_operand.vmem [shape: bf16[1,128,16], index: 0, kind: input, shape index: {}]
  %s1 = inlined_call_operand.vmem [shape: bf16[16,192], index: 1, kind: input, shape index: {}]
  %s2 = inlined_call_operand.vmem [shape: f32[1,192], index: 2, kind: input, shape index: {}]
  %s3 = inlined_call_operand.vmem [shape: bf16[64,128], index: 3, kind: input, shape index: {}]
  %s4 = inlined_call_operand.vmem [shape: f32[1,128], index: 4, kind: input, shape index: {}]
  %s5 = inlined_call_operand.vmem [shape: f32[1,16,128], index: 5, kind: input, shape index: {}]
  %s6 = inlined_call_operand.vmem [shape: f32[1,16,256], index: 6, kind: output, shape index: {}]
  %s7 = sld [smem:[#allocation0]]
  $region34: #{_srnn_cell_forward.1} parent=0
    _
  %s9 = ssub.s32 1, %s7
  %s10 = scalar_select 0, %s9, %s7
  // Predicated region
  $region2: #{_srnn_cell_forward.1} parent=0 // pred_check
    _
  $region3: #{_srnn_cell_forward.1} parent=0 // pred_check_branch
    %12 = sbr.rel (0) target = $region5
  $region4: #{_srnn_cell_forward.1} parent=0 // pred_region
    _
  $region5: #{_srnn_cell_forward.1} parent=0 // pred_fallthru
    _
  // Predicated region
  $region6: #{_srnn_cell_forward.1} parent=0 // pred_check
    _
  $region7: #{_srnn_cell_forward.1} parent=0 // pred_check_branch
    %14 = sbr.rel (0) target = $region9
  $region8: #{_srnn_cell_forward.1} parent=0 // pred_region
    _
  $region9: #{_srnn_cell_forward.1} parent=0 // pred_fallthru
    _
  // Predicated region
  $region10: #{_srnn_cell_forward.1} parent=0 // pred_check
    _
  $region11: #{_srnn_cell_forward.1} parent=0 // pred_check_branch
    %16 = sbr.rel (0) target = $region13
  $region12: #{_srnn_cell_forward.1} parent=0 // pred_region
    _
  $region13: #{_srnn_cell_forward.1} parent=0 // pred_fallthru
    _
  // Predicated region
  $region14: #{_srnn_cell_forward.1} parent=0 // pred_check
    _
  $region15: #{_srnn_cell_forward.1} parent=0 // pred_check_branch
    %18 = sbr.rel (0) target = $region17
  $region16: #{_srnn_cell_forward.1} parent=0 // pred_region
    _
  $region17: #{_srnn_cell_forward.1} parent=0 // pred_fallthru
    _
  // Predicated region
  $region18: #{_srnn_cell_forward.1} parent=0 // pred_check
    _
  $region19: #{_srnn_cell_forward.1} parent=0 // pred_check_branch
    %20 = sbr.rel (0) target = $region21
  $region20: #{_srnn_cell_forward.1} parent=0 // pred_region
    _
  $region21: #{_srnn_cell_forward.1} parent=0 // pred_fallthru
    _
  // Predicated region
  $region22: #{_srnn_cell_forward.1} parent=0 // pred_check
    _
  $region23: #{_srnn_cell_forward.1} parent=0 // pred_check_branch
    %22 = sbr.rel (0) target = $region25
  $region24: #{_srnn_cell_forward.1} parent=0 // pred_region
    _
  $region25: #{_srnn_cell_forward.1} parent=0 // pred_fallthru
    _
  %v24 = vld [vmem:[%s0] sm:$0xf]
  %v25 = vld [vmem:[%s0 + $0x4] sm:$0xf]
  %v26 = vld [vmem:[%s0 + $0x8] sm:$0xf]
  %v27 = vld [vmem:[%s0 + $0xc] sm:$0xf]
  %v28 = vld [vmem:[%s0 + $0x10] sm:$0xf]
  %v29 = vld [vmem:[%s0 + $0x14] sm:$0xf]
  %v30 = vld [vmem:[%s0 + $0x18] sm:$0xf]
  %v31 = vld [vmem:[%s0 + $0x1c] sm:$0xf]
  %v32 = vld [vmem:[%s0 + $0x20] sm:$0xf]
  %v33 = vld [vmem:[%s0 + $0x24] sm:$0xf]
  %v34 = vld [vmem:[%s0 + $0x28] sm:$0xf]
  %v35 = vld [vmem:[%s0 + $0x2c] sm:$0xf]
  %v36 = vld [vmem:[%s0 + $0x30] sm:$0xf]
  %v37 = vld [vmem:[%s0 + $0x34] sm:$0xf]
  %v38 = vld [vmem:[%s0 + $0x38] sm:$0xf]
  %v39 = vld [vmem:[%s0 + $0x3c] sm:$0xf]
  %v40 = vld [vmem:[%s1] sm:$0xff]
  %v41 = vld [vmem:[%s1 + $0x8] sm:$0xff]
  %v42 = vld [vmem:[%s2] sm:$0x3]
  %v44 = vlaneseq
  %v45 = vshrl.u32 %v44, 7
  %v46 = vsub.s32 0, %v45
  %v47 = vrot.slane %v42, %v46
  %v48 = vlaneseq
  %v49 = vshrl.u32 %v48, 7
  %v50 = vsub.s32 1, %v49
  %v51 = vrot.slane %v42, %v50
  %v70 = vunpack.c.l.b16 %v24
  %v71 = vunpack.c.l.b16 %v25
  %v72 = vunpack.c.l.b16 %v26
  %v73 = vunpack.c.l.b16 %v27
  %v74 = vunpack.c.l.b16 %v28
  %v75 = vunpack.c.l.b16 %v29
  %v76 = vunpack.c.l.b16 %v30
  %v77 = vunpack.c.l.b16 %v31
  %v78 = vunpack.c.l.b16 %v32
  %v79 = vunpack.c.l.b16 %v33
  %v80 = vunpack.c.l.b16 %v34
  %v81 = vunpack.c.l.b16 %v35
  %v82 = vunpack.c.l.b16 %v36
  %v83 = vunpack.c.l.b16 %v37
  %v84 = vunpack.c.l.b16 %v38
  %v85 = vunpack.c.l.b16 %v39
  %v86 = vpack.c.b16 %v71, %v70
  %v87 = vpack.c.b16 %v73, %v72
  %v88 = vpack.c.b16 %v75, %v74
  %v89 = vpack.c.b16 %v77, %v76
  %v90 = vpack.c.b16 %v79, %v78
  %v91 = vpack.c.b16 %v81, %v80
  %v92 = vpack.c.b16 %v83, %v82
  %v93 = vpack.c.b16 %v85, %v84
  %v96 = vunpack.c.l.b16 %v40
  %v97 = vunpack.c.h.b16 %v40
  %v98 = vunpack.c.l.b16 %v41
  %v99 = vunpack.c.h.b16 %v41
  %v100 = vpack.c.b16 %v98, %v96
  %v101 = vpack.c.b16 %v99, %v97
  %vm104 = vcmask 130048
  %v106 = vsel %vm104, %v86, 0
  %v109 = vsel %vm104, %v87, 0
  %v112 = vsel %vm104, %v88, 0
  %v115 = vsel %vm104, %v89, 0
  %v118 = vsel %vm104, %v90, 0
  %v121 = vsel %vm104, %v91, 0
  %v124 = vsel %vm104, %v92, 0
  %v127 = vsel %vm104, %v93, 0
  %129 = vmatprep.subr.bf16.mxu0 %v101
  %130 = vmatpush1.bf16.msra.mxu0 %v100
  %131 = vmatprep.subr.bf16.mxu0 0
  %132 = vmatpush1.bf16.msra.mxu0 0
  %133 = vmatprep.subr.bf16.mxu0 0
  %134 = vmatpush1.bf16.msra.mxu0 0
  %135 = vmatprep.subr.bf16.mxu0 0
  %136 = vmatpush1.bf16.msra.mxu0 0
  %137 = vmatprep.subr.bf16.mxu0 0
  %138 = vmatpush1.bf16.msra.mxu0 0
  %139 = vmatprep.subr.bf16.mxu0 0
  %140 = vmatpush1.bf16.msra.mxu0 0
  %141 = vmatprep.subr.bf16.mxu0 0
  %142 = vmatpush1.bf16.msra.mxu0 0
  %143 = vmatprep.subr.bf16.mxu0 0
  %144 = vmatpush1.bf16.msra.mxu0 0
  %145 = vmatprep.subr.bf16.mxu0 0
  %146 = vmatpush1.bf16.msra.mxu0 0
  %147 = vmatprep.subr.bf16.mxu0 0
  %148 = vmatpush1.bf16.msra.mxu0 0
  %149 = vmatprep.subr.bf16.mxu0 0
  %150 = vmatpush1.bf16.msra.mxu0 0
  %151 = vmatprep.subr.bf16.mxu0 0
  %152 = vmatpush1.bf16.msra.mxu0 0
  %153 = vmatprep.subr.bf16.mxu0 0
  %154 = vmatpush1.bf16.msra.mxu0 0
  %155 = vmatprep.subr.bf16.mxu0 0
  %156 = vmatpush1.bf16.msra.mxu0 0
  %157 = vmatprep.subr.bf16.mxu0 0
  %158 = vmatpush1.bf16.msra.mxu0 0
  %159 = vmatprep.subr.bf16.mxu0 0
  %160 = vmatpush1.bf16.msra.mxu0 0
  %161 = vmatprep.mubr.bf16.mxu0 0
  %162 = vmatmul.mubr.bf16.gmra.mrb[0].mxu0 %v106
  %v163 = vpop.f32.mrb[0].mxu0
  %v164 = vadd.f32 %v47, %v163
  %v165 = vpop.f32.mrb[0].mxu0
  %v166 = vadd.f32 %v51, %v165
  %v167 = vpop.f32.mrb[0].mxu0
  %v168 = vadd.f32 %v47, %v167
  %v169 = vpop.f32.mrb[0].mxu0
  %v170 = vadd.f32 %v51, %v169
  %171 = vmatprep.mubr.bf16.mxu0 0
  %172 = vmatmul.mubr.bf16.gmra.mrb[0].mxu0 %v109
  %v173 = vpop.f32.mrb[0].mxu0
  %v174 = vadd.f32 %v47, %v173
  %v175 = vpop.f32.mrb[0].mxu0
  %v176 = vadd.f32 %v51, %v175
  %v177 = vpop.f32.mrb[0].mxu0
  %v178 = vadd.f32 %v47, %v177
  %v179 = vpop.f32.mrb[0].mxu0
  %v180 = vadd.f32 %v51, %v179
  %181 = vmatprep.mubr.bf16.mxu0 0
  %182 = vmatmul.mubr.bf16.gmra.mrb[0].mxu0 %v112
  %v183 = vpop.f32.mrb[0].mxu0
  %v184 = vadd.f32 %v47, %v183
  %v185 = vpop.f32.mrb[0].mxu0
  %v186 = vadd.f32 %v51, %v185
  %v187 = vpop.f32.mrb[0].mxu0
  %v188 = vadd.f32 %v47, %v187
  %v189 = vpop.f32.mrb[0].mxu0
  %v190 = vadd.f32 %v51, %v189
  %191 = vmatprep.mubr.bf16.mxu0 0
  %192 = vmatmul.mubr.bf16.gmra.mrb[0].mxu0 %v115
  %v193 = vpop.f32.mrb[0].mxu0
  %v194 = vadd.f32 %v47, %v193
  %v195 = vpop.f32.mrb[0].mxu0
  %v196 = vadd.f32 %v51, %v195
  %v197 = vpop.f32.mrb[0].mxu0
  %v198 = vadd.f32 %v47, %v197
  %v199 = vpop.f32.mrb[0].mxu0
  %v200 = vadd.f32 %v51, %v199
  %201 = vmatprep.mubr.bf16.mxu0 0
  %202 = vmatmul.mubr.bf16.gmra.mrb[0].mxu0 %v118
  %v203 = vpop.f32.mrb[0].mxu0
  %v204 = vadd.f32 %v47, %v203
  %v205 = vpop.f32.mrb[0].mxu0
  %v206 = vadd.f32 %v51, %v205
  %v207 = vpop.f32.mrb[0].mxu0
  %v208 = vadd.f32 %v47, %v207
  %v209 = vpop.f32.mrb[0].mxu0
  %v210 = vadd.f32 %v51, %v209
  %211 = vmatprep.mubr.bf16.mxu0 0
  %212 = vmatmul.mubr.bf16.gmra.mrb[0].mxu0 %v121
  %v213 = vpop.f32.mrb[0].mxu0
  %v214 = vadd.f32 %v47, %v213
  %v215 = vpop.f32.mrb[0].mxu0
  %v216 = vadd.f32 %v51, %v215
  %v217 = vpop.f32.mrb[0].mxu0
  %v218 = vadd.f32 %v47, %v217
  %v219 = vpop.f32.mrb[0].mxu0
  %v220 = vadd.f32 %v51, %v219
  %221 = vmatprep.mubr.bf16.mxu0 0
  %222 = vmatmul.mubr.bf16.gmra.mrb[0].mxu0 %v124
  %v223 = vpop.f32.mrb[0].mxu0
  %v224 = vadd.f32 %v47, %v223
  %v225 = vpop.f32.mrb[0].mxu0
  %v226 = vadd.f32 %v51, %v225
  %v227 = vpop.f32.mrb[0].mxu0
  %v228 = vadd.f32 %v47, %v227
  %v229 = vpop.f32.mrb[0].mxu0
  %v230 = vadd.f32 %v51, %v229
  %231 = vmatprep.mubr.bf16.mxu0 0
  %232 = vmatmul.mubr.bf16.gmra.mrb[0].mxu0 %v127
  %v233 = vpop.f32.mrb[0].mxu0
  %v234 = vadd.f32 %v47, %v233
  %v235 = vpop.f32.mrb[0].mxu0
  %v236 = vadd.f32 %v51, %v235
  %v237 = vpop.f32.mrb[0].mxu0
  %v238 = vadd.f32 %v47, %v237
  %v239 = vpop.f32.mrb[0].mxu0
  %v240 = vadd.f32 %v51, %v239
  %241 = vdwg.mxu0
  %v242 = vxor.u32 %v164, 2147483648
  %v243 = vxor.u32 %v168, 2147483648
  %v244 = vxor.u32 %v174, 2147483648
  %v245 = vxor.u32 %v178, 2147483648
  %v246 = vxor.u32 %v184, 2147483648
  %v247 = vxor.u32 %v188, 2147483648
  %v248 = vxor.u32 %v194, 2147483648
  %v249 = vxor.u32 %v198, 2147483648
  %v250 = vxor.u32 %v204, 2147483648
  %v251 = vxor.u32 %v208, 2147483648
  %v252 = vxor.u32 %v214, 2147483648
  %v253 = vxor.u32 %v218, 2147483648
  %v254 = vxor.u32 %v224, 2147483648
  %v255 = vxor.u32 %v228, 2147483648
  %v256 = vxor.u32 %v234, 2147483648
  %v257 = vxor.u32 %v238, 2147483648
  %v258 = vmul.f32 %v242, 1.442695
  %v259 = vpow.pop %v258
  %v260 = vmul.f32 %v243, 1.442695
  %v261 = vpow.pop %v260
  %v262 = vmul.f32 %v244, 1.442695
  %v263 = vpow.pop %v262
  %v264 = vmul.f32 %v245, 1.442695
  %v265 = vpow.pop %v264
  %v266 = vmul.f32 %v246, 1.442695
  %v267 = vpow.pop %v266
  %v268 = vmul.f32 %v247, 1.442695
  %v269 = vpow.pop %v268
  %v270 = vmul.f32 %v248, 1.442695
  %v271 = vpow.pop %v270
  %v272 = vmul.f32 %v249, 1.442695
  %v273 = vpow.pop %v272
  %v274 = vmul.f32 %v250, 1.442695
  %v275 = vpow.pop %v274
  %v276 = vmul.f32 %v251, 1.442695
  %v277 = vpow.pop %v276
  %v278 = vmul.f32 %v252, 1.442695
  %v279 = vpow.pop %v278
  %v280 = vmul.f32 %v253, 1.442695
  %v281 = vpow.pop %v280
  %v282 = vmul.f32 %v254, 1.442695
  %v283 = vpow.pop %v282
  %v284 = vmul.f32 %v255, 1.442695
  %v285 = vpow.pop %v284
  %v286 = vmul.f32 %v256, 1.442695
  %v287 = vpow.pop %v286
  %v288 = vmul.f32 %v257, 1.442695
  %v289 = vpow.pop %v288
  %v290 = vadd.f32 %v259, 1.0
  %v291 = vadd.f32 %v261, 1.0
  %v292 = vadd.f32 %v263, 1.0
  %v293 = vadd.f32 %v265, 1.0
  %v294 = vadd.f32 %v267, 1.0
  %v295 = vadd.f32 %v269, 1.0
  %v296 = vadd.f32 %v271, 1.0
  %v297 = vadd.f32 %v273, 1.0
  %v298 = vadd.f32 %v275, 1.0
  %v299 = vadd.f32 %v277, 1.0
  %v300 = vadd.f32 %v279, 1.0
  %v301 = vadd.f32 %v281, 1.0
  %v302 = vadd.f32 %v283, 1.0
  %v303 = vadd.f32 %v285, 1.0
  %v304 = vadd.f32 %v287, 1.0
  %v305 = vadd.f32 %v289, 1.0
  %v306 = vrcp.pop %v290
  %v307 = vmul.f32 1.0, %v306
  %v308 = vrcp.pop %v291
  %v309 = vmul.f32 1.0, %v308
  %v310 = vrcp.pop %v292
  %v311 = vmul.f32 1.0, %v310
  %v312 = vrcp.pop %v293
  %v313 = vmul.f32 1.0, %v312
  %v314 = vrcp.pop %v294
  %v315 = vmul.f32 1.0, %v314
  %v316 = vrcp.pop %v295
  %v317 = vmul.f32 1.0, %v316
  %v318 = vrcp.pop %v296
  %v319 = vmul.f32 1.0, %v318
  %v320 = vrcp.pop %v297
  %v321 = vmul.f32 1.0, %v320
  %v322 = vrcp.pop %v298
  %v323 = vmul.f32 1.0, %v322
  %v324 = vrcp.pop %v299
  %v325 = vmul.f32 1.0, %v324
  %v326 = vrcp.pop %v300
  %v327 = vmul.f32 1.0, %v326
  %v328 = vrcp.pop %v301
  %v329 = vmul.f32 1.0, %v328
  %v330 = vrcp.pop %v302
  %v331 = vmul.f32 1.0, %v330
  %v332 = vrcp.pop %v303
  %v333 = vmul.f32 1.0, %v332
  %v334 = vrcp.pop %v304
  %v335 = vmul.f32 1.0, %v334
  %v336 = vrcp.pop %v305
  %v337 = vmul.f32 1.0, %v336
  %v338 = vmax.f32 %v166, 0.0
  %v339 = vmax.f32 %v170, 0.0
  %v340 = vmax.f32 %v176, 0.0
  %v341 = vmax.f32 %v180, 0.0
  %v342 = vmax.f32 %v186, 0.0
  %v343 = vmax.f32 %v190, 0.0
  %v344 = vmax.f32 %v196, 0.0
  %v345 = vmax.f32 %v200, 0.0
  %v346 = vmax.f32 %v206, 0.0
  %v347 = vmax.f32 %v210, 0.0
  %v348 = vmax.f32 %v216, 0.0
  %v349 = vmax.f32 %v220, 0.0
  %v350 = vmax.f32 %v226, 0.0
  %v351 = vmax.f32 %v230, 0.0
  %v352 = vmax.f32 %v236, 0.0
  %v353 = vmax.f32 %v240, 0.0
  %v354 = vpack.c.bf16 %v339, %v338
  %v355 = vpack.c.bf16 %v341, %v340
  %v356 = vpack.c.bf16 %v343, %v342
  %v357 = vpack.c.bf16 %v345, %v344
  %v358 = vpack.c.bf16 %v347, %v346
  %v359 = vpack.c.bf16 %v349, %v348
  %v360 = vpack.c.bf16 %v351, %v350
  %v361 = vpack.c.bf16 %v353, %v352
  %v362 = vld [vmem:[%s3] sm:$0xf]
  %v363 = vld [vmem:[%s3 + $0x4] sm:$0xf]
  %v364 = vld [vmem:[%s3 + $0x8] sm:$0xf]
  %v365 = vld [vmem:[%s3 + $0xc] sm:$0xf]
  %v366 = vld [vmem:[%s3 + $0x10] sm:$0xf]
  %v367 = vld [vmem:[%s3 + $0x14] sm:$0xf]
  %v368 = vld [vmem:[%s3 + $0x18] sm:$0xf]
  %v369 = vld [vmem:[%s3 + $0x1c] sm:$0xf]
  %v370 = vld [vmem:[%s4] sm:$0x1]
  %v372 = vlaneseq
  %v373 = vshrl.u32 %v372, 7
  %v374 = vsub.s32 0, %v373
  %v375 = vrot.slane %v370, %v374
  %v385 = vunpack.c.l.b16 %v362
  %v386 = vunpack.c.l.b16 %v363
  %v387 = vunpack.c.l.b16 %v364
  %v388 = vunpack.c.l.b16 %v365
  %v389 = vunpack.c.l.b16 %v366
  %v390 = vunpack.c.l.b16 %v367
  %v391 = vunpack.c.l.b16 %v368
  %v392 = vunpack.c.l.b16 %v369
  %v393 = vpack.c.b16 %v386, %v385
  %v394 = vpack.c.b16 %v388, %v387
  %v395 = vpack.c.b16 %v390, %v389
  %v396 = vpack.c.b16 %v392, %v391
  %vm401 = vcmask 523264
  %v403 = vsel %vm401, %v354, 0
  %v406 = vsel %vm401, %v355, 0
  %v409 = vsel %vm401, %v356, 0
  %v412 = vsel %vm401, %v357, 0
  %v415 = vsel %vm401, %v358, 0
  %v418 = vsel %vm401, %v359, 0
  %v421 = vsel %vm401, %v360, 0
  %v424 = vsel %vm401, %v361, 0
  %426 = vmatprep.subr.bf16.mxu0 0
  %427 = vmatpush1.bf16.msra.mxu0 %v393
  %428 = vmatprep.subr.bf16.mxu0 0
  %429 = vmatpush1.bf16.msra.mxu0 %v394
  %430 = vmatprep.subr.bf16.mxu0 0
  %431 = vmatpush1.bf16.msra.mxu0 %v395
  %432 = vmatprep.subr.bf16.mxu0 0
  %433 = vmatpush1.bf16.msra.mxu0 %v396
  %434 = vmatprep.subr.bf16.mxu0 0
  %435 = vmatpush1.bf16.msra.mxu0 0
  %436 = vmatprep.subr.bf16.mxu0 0
  %437 = vmatpush1.bf16.msra.mxu0 0
  %438 = vmatprep.subr.bf16.mxu0 0
  %439 = vmatpush1.bf16.msra.mxu0 0
  %440 = vmatprep.subr.bf16.mxu0 0
  %441 = vmatpush1.bf16.msra.mxu0 0
  %442 = vmatprep.subr.bf16.mxu0 0
  %443 = vmatpush1.bf16.msra.mxu0 0
  %444 = vmatprep.subr.bf16.mxu0 0
  %445 = vmatpush1.bf16.msra.mxu0 0
  %446 = vmatprep.subr.bf16.mxu0 0
  %447 = vmatpush1.bf16.msra.mxu0 0
  %448 = vmatprep.subr.bf16.mxu0 0
  %449 = vmatpush1.bf16.msra.mxu0 0
  %450 = vmatprep.subr.bf16.mxu0 0
  %451 = vmatpush1.bf16.msra.mxu0 0
  %452 = vmatprep.subr.bf16.mxu0 0
  %453 = vmatpush1.bf16.msra.mxu0 0
  %454 = vmatprep.subr.bf16.mxu0 0
  %455 = vmatpush1.bf16.msra.mxu0 0
  %456 = vmatprep.subr.bf16.mxu0 0
  %457 = vmatpush1.bf16.msra.mxu0 0
  %458 = vmatprep.mubr.bf16.mxu0 0
  %459 = vmatmul.mubr.bf16.gmra.mrb[0].mxu0 %v403
  %v460 = vpop.f32.mrb[0].mxu0
  %v461 = vadd.f32 %v375, %v460
  %v462 = vpop.f32.mrb[0].mxu0
  %v463 = vpop.f32.mrb[0].mxu0
  %v464 = vadd.f32 %v375, %v463
  %v465 = vpop.f32.mrb[0].mxu0
  %466 = vmatprep.mubr.bf16.mxu0 0
  %467 = vmatmul.mubr.bf16.gmra.mrb[0].mxu0 %v406
  %v468 = vpop.f32.mrb[0].mxu0
  %v469 = vadd.f32 %v375, %v468
  %v470 = vpop.f32.mrb[0].mxu0
  %v471 = vpop.f32.mrb[0].mxu0
  %v472 = vadd.f32 %v375, %v471
  %v473 = vpop.f32.mrb[0].mxu0
  %474 = vmatprep.mubr.bf16.mxu0 0
  %475 = vmatmul.mubr.bf16.gmra.mrb[0].mxu0 %v409
  %v476 = vpop.f32.mrb[0].mxu0
  %v477 = vadd.f32 %v375, %v476
  %v478 = vpop.f32.mrb[0].mxu0
  %v479 = vpop.f32.mrb[0].mxu0
  %v480 = vadd.f32 %v375, %v479
  %v481 = vpop.f32.mrb[0].mxu0
  %482 = vmatprep.mubr.bf16.mxu0 0
  %483 = vmatmul.mubr.bf16.gmra.mrb[0].mxu0 %v412
  %v484 = vpop.f32.mrb[0].mxu0
  %v485 = vadd.f32 %v375, %v484
  %v486 = vpop.f32.mrb[0].mxu0
  %v487 = vpop.f32.mrb[0].mxu0
  %v488 = vadd.f32 %v375, %v487
  %v489 = vpop.f32.mrb[0].mxu0
  %490 = vmatprep.mubr.bf16.mxu0 0
  %491 = vmatmul.mubr.bf16.gmra.mrb[0].mxu0 %v415
  %v492 = vpop.f32.mrb[0].mxu0
  %v493 = vadd.f32 %v375, %v492
  %v494 = vpop.f32.mrb[0].mxu0
  %v495 = vpop.f32.mrb[0].mxu0
  %v496 = vadd.f32 %v375, %v495
  %v497 = vpop.f32.mrb[0].mxu0
  %498 = vmatprep.mubr.bf16.mxu0 0
  %499 = vmatmul.mubr.bf16.gmra.mrb[0].mxu0 %v418
  %v500 = vpop.f32.mrb[0].mxu0
  %v501 = vadd.f32 %v375, %v500
  %v502 = vpop.f32.mrb[0].mxu0
  %v503 = vpop.f32.mrb[0].mxu0
  %v504 = vadd.f32 %v375, %v503
  %v505 = vpop.f32.mrb[0].mxu0
  %506 = vmatprep.mubr.bf16.mxu0 0
  %507 = vmatmul.mubr.bf16.gmra.mrb[0].mxu0 %v421
  %v508 = vpop.f32.mrb[0].mxu0
  %v509 = vadd.f32 %v375, %v508
  %v510 = vpop.f32.mrb[0].mxu0
  %v511 = vpop.f32.mrb[0].mxu0
  %v512 = vadd.f32 %v375, %v511
  %v513 = vpop.f32.mrb[0].mxu0
  %514 = vmatprep.mubr.bf16.mxu0 0
  %515 = vmatmul.mubr.bf16.gmra.mrb[0].mxu0 %v424
  %v516 = vpop.f32.mrb[0].mxu0
  %v517 = vadd.f32 %v375, %v516
  %v518 = vpop.f32.mrb[0].mxu0
  %v519 = vpop.f32.mrb[0].mxu0
  %v520 = vadd.f32 %v375, %v519
  %v521 = vpop.f32.mrb[0].mxu0
  %522 = vdwg.mxu0
  %v523 = vmul.f32 %v461, %v307
  %v524 = vmul.f32 %v464, %v309
  %v525 = vmul.f32 %v469, %v311
  %v526 = vmul.f32 %v472, %v313
  %v527 = vmul.f32 %v477, %v315
  %v528 = vmul.f32 %v480, %v317
  %v529 = vmul.f32 %v485, %v319
  %v530 = vmul.f32 %v488, %v321
  %v531 = vmul.f32 %v493, %v323
  %v532 = vmul.f32 %v496, %v325
  %v533 = vmul.f32 %v501, %v327
  %v534 = vmul.f32 %v504, %v329
  %v535 = vmul.f32 %v509, %v331
  %v536 = vmul.f32 %v512, %v333
  %v537 = vmul.f32 %v517, %v335
  %v538 = vmul.f32 %v520, %v337
  %v539 = vld [vmem:[%s5] sm:$0xff]
  %v540 = vld [vmem:[%s5 + $0x8] sm:$0xff]
  %541 = vrot.lane.b32.xlu0 %v539, 1
  %v542 = vpop.permute.xlu0 %541
  %543 = vrot.lane.b32.xlu0 %v540, 1
  %v544 = vpop.permute.xlu0 %543
  %v545 = vadd.f32 %v523, %v542
  %v546 = vadd.f32 %v524, %v544
  %v547 = vmax.f32 %v545, 0.0
  %v548 = vmax.f32 %v546, 0.0
  %vm549 = vcmask 261120
  %550 = vst.msk [vmem:[%s6] sm:$0xff] %vm549, %v547
  %551 = vst.msk [vmem:[%s6 + $0x10] sm:$0xff] %vm549, %v548
  %552 = vrot.lane.b32.xlu0 %v547, 1
  %v553 = vpop.permute.xlu0 %552
  %554 = vrot.lane.b32.xlu0 %v548, 1
  %v555 = vpop.permute.xlu0 %554
  %v556 = vadd.f32 %v525, %v553
  %v557 = vadd.f32 %v526, %v555
  %v558 = vmax.f32 %v556, 0.0
  %v559 = vmax.f32 %v557, 0.0
  %562 = vrot.lane.b32.xlu0 %v558, 32
  %v563 = vpop.permute.xlu0 %562
  %564 = vrot.lane.b32.xlu0 %v559, 32
  %v565 = vpop.permute.xlu0 %564
  %vm568 = vcmask 523520
  %569 = vst.msk [vmem:[%s6] sm:$0xff] %vm568, %v563
  %570 = vst.msk [vmem:[%s6 + $0x10] sm:$0xff] %vm568, %v565
  %571 = vrot.lane.b32.xlu0 %v558, 1
  %v572 = vpop.permute.xlu0 %571
  %573 = vrot.lane.b32.xlu0 %v559, 1
  %v574 = vpop.permute.xlu0 %573
  %v575 = vadd.f32 %v527, %v572
  %v576 = vadd.f32 %v528, %v574
  %v577 = vmax.f32 %v575, 0.0
  %v578 = vmax.f32 %v576, 0.0
  %581 = vrot.lane.b32.xlu0 %v577, 64
  %v582 = vpop.permute.xlu0 %581
  %583 = vrot.lane.b32.xlu0 %v578, 64
  %v584 = vpop.permute.xlu0 %583
  %vm587 = vcmask 785920
  %588 = vst.msk [vmem:[%s6] sm:$0xff] %vm587, %v582
  %589 = vst.msk [vmem:[%s6 + $0x10] sm:$0xff] %vm587, %v584
  %590 = vrot.lane.b32.xlu0 %v577, 1
  %v591 = vpop.permute.xlu0 %590
  %592 = vrot.lane.b32.xlu0 %v578, 1
  %v593 = vpop.permute.xlu0 %592
  %v594 = vadd.f32 %v529, %v591
  %v595 = vadd.f32 %v530, %v593
  %v596 = vmax.f32 %v594, 0.0
  %v597 = vmax.f32 %v595, 0.0
  %600 = vrot.lane.b32.xlu0 %v596, 96
  %v601 = vpop.permute.xlu0 %600
  %602 = vrot.lane.b32.xlu0 %v597, 96
  %v603 = vpop.permute.xlu0 %602
  %vm606 = vcmask 1048320
  %607 = vst.msk [vmem:[%s6] sm:$0xff] %vm606, %v601
  %608 = vst.msk [vmem:[%s6 + $0x10] sm:$0xff] %vm606, %v603
  %609 = vrot.lane.b32.xlu0 %v596, 1
  %v610 = vpop.permute.xlu0 %609
  %611 = vrot.lane.b32.xlu0 %v597, 1
  %v612 = vpop.permute.xlu0 %611
  %v613 = vadd.f32 %v531, %v610
  %v614 = vadd.f32 %v532, %v612
  %v615 = vmax.f32 %v613, 0.0
  %v616 = vmax.f32 %v614, 0.0
  %617 = vst.msk [vmem:[%s6 + $0x8] sm:$0xff] %vm549, %v615
  %618 = vst.msk [vmem:[%s6 + $0x18] sm:$0xff] %vm549, %v616
  %619 = vrot.lane.b32.xlu0 %v615, 1
  %v620 = vpop.permute.xlu0 %619
  %621 = vrot.lane.b32.xlu0 %v616, 1
  %v622 = vpop.permute.xlu0 %621
  %v623 = vadd.f32 %v533, %v620
  %v624 = vadd.f32 %v534, %v622
  %v625 = vmax.f32 %v623, 0.0
  %v626 = vmax.f32 %v624, 0.0
  %629 = vrot.lane.b32.xlu0 %v625, 32
  %v630 = vpop.permute.xlu0 %629
  %631 = vrot.lane.b32.xlu0 %v626, 32
  %v632 = vpop.permute.xlu0 %631
  %635 = vst.msk [vmem:[%s6 + $0x8] sm:$0xff] %vm568, %v630
  %636 = vst.msk [vmem:[%s6 + $0x18] sm:$0xff] %vm568, %v632
  %637 = vrot.lane.b32.xlu0 %v625, 1
  %v638 = vpop.permute.xlu0 %637
  %639 = vrot.lane.b32.xlu0 %v626, 1
  %v640 = vpop.permute.xlu0 %639
  %v641 = vadd.f32 %v535, %v638
  %v642 = vadd.f32 %v536, %v640
  %v643 = vmax.f32 %v641, 0.0
  %v644 = vmax.f32 %v642, 0.0
  %647 = vrot.lane.b32.xlu0 %v643, 64
  %v648 = vpop.permute.xlu0 %647
  %649 = vrot.lane.b32.xlu0 %v644, 64
  %v650 = vpop.permute.xlu0 %649
  %653 = vst.msk [vmem:[%s6 + $0x8] sm:$0xff] %vm587, %v648
  %654 = vst.msk [vmem:[%s6 + $0x18] sm:$0xff] %vm587, %v650
  %655 = vrot.lane.b32.xlu0 %v643, 1
  %v656 = vpop.permute.xlu0 %655
  %657 = vrot.lane.b32.xlu0 %v644, 1
  %v658 = vpop.permute.xlu0 %657
  %v659 = vadd.f32 %v537, %v656
  %v660 = vadd.f32 %v538, %v658
  %v661 = vmax.f32 %v659, 0.0
  %v662 = vmax.f32 %v660, 0.0
  %665 = vrot.lane.b32.xlu0 %v661, 96
  %v666 = vpop.permute.xlu0 %665
  %667 = vrot.lane.b32.xlu0 %v662, 96
  %v668 = vpop.permute.xlu0 %667
  %671 = vst.msk [vmem:[%s6 + $0x8] sm:$0xff] %vm606, %v666
  %672 = vst.msk [vmem:[%s6 + $0x18] sm:$0xff] %vm606, %v668
  // Predicated region
  $region26: #{_srnn_cell_forward.1} parent=0 // pred_check
    _
  $region27: #{_srnn_cell_forward.1} parent=0 // pred_check_branch
    %674 = sbr.rel (0) target = $region29
  $region28: #{_srnn_cell_forward.1} parent=0 // pred_region
    _
  $region29: #{_srnn_cell_forward.1} parent=0 // pred_fallthru
    _
  // Predicated region
  $region30: #{_srnn_cell_forward.1} parent=0 // pred_check
    _
  $region31: #{_srnn_cell_forward.1} parent=0 // pred_check_branch
    %676 = sbr.rel (0) target = $region33
  $region32: #{_srnn_cell_forward.1} parent=0 // pred_region
    _
  $region33: #{_srnn_cell_forward.1} parent=0 // pred_fallthru
    _

</llo_original>
